<compile_context>
chip_gen: v6e
topology: v6e:2x2x1
jax: 0.10.0
libtpu: 0.0.40
codegen_flags: <defaults>
</compile_context>

<pallas_src>
import functools

import jax
import jax.numpy as jnp
from jax.experimental import pallas as pl
from jax.experimental.pallas import tpu as pltpu


def _round_up(v, m):
    return ((v + m - 1) // m) * m


def _tpu_caps():
    """Returns (per-core VMEM capacity bytes, chip has 2 TensorCores/device)."""
    vmem_cap = 64 * 1024 * 1024           # conservative default (v7x per-TC)
    try:
        vmem_cap = int(pltpu.get_tpu_info().vmem_capacity_bytes)
    except Exception:
        pass
    two_tc = False
    try:
        kind = jax.devices()[0].device_kind.lower()
        two_tc = "7" in kind              # v7x: 2 TCs/chip -> keep grid >= 2
    except Exception:
        pass
    return vmem_cap, two_tc


def _gcn_kernel(adj_ref, x_ref, w_ref, b2_ref, wfin_ref, bout_ref, out_ref,
                slab_ref, *, layers, mem_dim_p, head_dim_p):
    bt, n_p, _ = adj_ref.shape
    w_full = slab_ref.shape[-1]
    cdt = slab_ref.dtype

    # Persistent outputs slab: [x | g_0 | ... | g_{L-1}], each chunk padded to a
    # multiple of 128 lanes.  The g region is intentionally NOT zeroed: every
    # layer only contracts over the columns already written, and each chunk
    # (including its zero-padded lanes) is fully stored before it is read.
    slab_ref[:, :, :mem_dim_p] = x_ref[...]

    # denom = adj.sum(-1) + 1 == adj_hat.sum(-1); one approx reciprocal (EUP).
    denom = jnp.sum(adj_ref[...].astype(jnp.float32), axis=-1, keepdims=True)
    inv_denom = pl.reciprocal(denom, approx=True)            # (bt, n_p, 1) f32

    for l in range(layers):            # static unroll: shapes differ per layer
        cols = mem_dim_p + l * head_dim_p                    # 128-aligned
        # (A + I) @ [x | g_0 .. g_{l-1}]  -- batched over the tile's samples.
        ax = jnp.einsum("bij,bjk->bik", adj_ref[...], slab_ref[:, :, :cols],
                        preferred_element_type=jnp.float32)
        # Batched W matmul over bt*n_p rows (fills the MXU M dimension).
        ax2 = ax.reshape(bt * n_p, cols).astype(cdt)         # free merge
        axw = jnp.dot(ax2, w_ref[l, :cols, :],
                      preferred_element_type=jnp.float32)
        axw = axw.reshape(bt, n_p, head_dim_p)               # free split
        g = jnp.maximum((axw + b2_ref[l]) * inv_denom, 0.0)  # bias pre-doubled
        slab_ref[:, :, cols:cols + head_dim_p] = g.astype(cdt)
        # TODO(synk): nn.Dropout(gcn_dropout) treated as identity (eval mode);
        # training-mode dropout could use pltpu.prng_*.

    # Output Linear; the residual (+x) is folded into wfin's x-chunk rows.
    slab2 = slab_ref[...].reshape(bt * n_p, w_full)
    out = jnp.dot(slab2, wfin_ref[...], preferred_element_type=jnp.float32)
    out = (out + bout_ref[...]).reshape(bt, n_p, mem_dim_p)
    out_ref[...] = out.astype(out_ref.dtype)


def graph_conv_layer(adj, x, w_list, b_list, w_out, b_out, *, mem_dim, layers,
                     bt_max=16, compute_dtype=jnp.bfloat16):
    """adj: (B,N,N) f32, x: (B,N,mem_dim) f32.
    w_list[l]: (mem_dim + head_dim*l, head_dim), b_list[l]: (head_dim,)
    w_out: (mem_dim, mem_dim) (in,out layout), b_out: (mem_dim,)."""
    B, N, _ = adj.shape
    assert mem_dim % layers == 0, "mem_dim must be divisible by layers"
    head_dim = mem_dim // layers

    LANE = 128
    bpe = jnp.dtype(compute_dtype).itemsize
    sub = 8 * max(1, 4 // bpe)            # sublane tile: 8 (f32) / 16 (bf16)
    mem_dim_p = _round_up(mem_dim, LANE)
    head_dim_p = _round_up(head_dim, LANE)
    # TODO(synk): when head_dim << 128 a packed (unaligned-stride) slab would
    # shrink w_full further at the cost of masked per-layer stores.
    w_full = mem_dim_p + layers * head_dim_p
    N_p = _round_up(N, sub)               # free (bt,N_p,.) <-> (bt*N_p,.) reshapes

    vmem_cap, two_tc = _tpu_caps()

    # --- batch tile: bt samples per grid step ---------------------------------
    limit = max(1, min(bt_max, B))
    if two_tc and B >= 2:
        limit = min(limit, max(1, B // 2))    # keep grid >= 2 (both v7x TCs)
    bt = 1
    for cand in range(1, limit + 1):
        if B % cand == 0:
            bt = cand

    def _est_bytes(bt_):
        var = 2 * bt_ * N_p * N_p * bpe                   # adj_hat (dbl-buffered)
        var += 2 * bt_ * N_p * mem_dim_p * bpe            # x
        var += 2 * bt_ * N_p * mem_dim_p * 4              # out (f32)
        var += bt_ * N_p * w_full * bpe                   # persistent slab
        var += bt_ * N_p * (w_full * (4 + bpe) + mem_dim_p * 4)   # f32 temps
        fixed = 2 * ((layers * w_full * head_dim_p + w_full * mem_dim_p) * bpe
                     + (layers * head_dim_p + mem_dim_p) * 4)     # weights
        return var + fixed

    budget = max(int(0.65 * vmem_cap), 24 << 20)
    while bt > 1 and _est_bytes(bt) > budget:
        bt -= 1
        while B % bt != 0:
            bt -= 1
    vmem_limit = int(min(max(int(1.25 * _est_bytes(bt)), 32 << 20),
                         int(0.85 * vmem_cap)))
    vmem_limit = int(max(vmem_limit, _est_bytes(bt)))

    # --- host-side padded / fused operands -----------------------------------
    # adj_hat = adj + I, padded to N_p.  Padded rows only carry the diagonal 1,
    # so their denom is 1 and they stay finite; real rows never read them.
    adj_p = jnp.pad(adj, ((0, 0), (0, N_p - N), (0, N_p - N)))
    adj_hat = adj_p + jnp.eye(N_p, dtype=adj.dtype)[None]
    x_p = jnp.pad(x, ((0, 0), (0, N_p - N), (0, mem_dim_p - mem_dim)))
    adj_c = adj_hat.astype(compute_dtype)
    x_c = x_p.astype(compute_dtype)

    # Per-layer weights laid out against the padded slab columns.
    w_all = jnp.zeros((layers, w_full, head_dim_p), jnp.float32)
    b2_all = jnp.zeros((layers, 1, head_dim_p), jnp.float32)
    for l in range(layers):
        w_l = w_list[l].astype(jnp.float32)        # (mem_dim + head_dim*l, hd)
        w_all = w_all.at[l, :mem_dim, :head_dim].set(w_l[:mem_dim])
        for j in range(l):
            dst = mem_dim_p + j * head_dim_p
            src = mem_dim + j * head_dim
            w_all = w_all.at[l, dst:dst + head_dim, :head_dim].set(
                w_l[src:src + head_dim])
        b2_all = b2_all.at[l, 0, :head_dim].set(2.0 * b_list[l])

    # Final projection weight: applies w_out to concat(g_0..g_{L-1}) AND to the
    # x chunk (the residual), all in one lane-dense matmul.
    w_fin = jnp.zeros((w_full, mem_dim_p), jnp.float32)
    w_fin = w_fin.at[:mem_dim, :mem_dim].set(w_out)
    for l in range(layers):
        dst = mem_dim_p + l * head_dim_p
        w_fin = w_fin.at[dst:dst + head_dim, :mem_dim].set(
            w_out[l * head_dim:(l + 1) * head_dim])
    b_out_p = jnp.zeros((1, mem_dim_p), jnp.float32).at[0, :mem_dim].set(b_out)

    w_all_c = w_all.astype(compute_dtype)
    w_fin_c = w_fin.astype(compute_dtype)

    kernel = functools.partial(_gcn_kernel, layers=layers,
                               mem_dim_p=mem_dim_p, head_dim_p=head_dim_p)

    out_p = pl.pallas_call(
        kernel,
        out_shape=jax.ShapeDtypeStruct((B, N_p, mem_dim_p), x.dtype),
        grid_spec=pltpu.PrefetchScalarGridSpec(
            num_scalar_prefetch=0,
            grid=(B // bt,),
            in_specs=[
                pl.BlockSpec((bt, N_p, N_p), lambda b: (b, 0, 0)),
                pl.BlockSpec((bt, N_p, mem_dim_p), lambda b: (b, 0, 0)),
                # Grid-invariant operands: constant block index, so the already
                # fetched buffers are reused across grid steps (their VMEM is
                # tiny, so default pipelining is kept).
                pl.BlockSpec((layers, w_full, head_dim_p), lambda b: (0, 0, 0)),
                pl.BlockSpec((layers, 1, head_dim_p), lambda b: (0, 0, 0)),
                pl.BlockSpec((w_full, mem_dim_p), lambda b: (0, 0)),
                pl.BlockSpec((1, mem_dim_p), lambda b: (0, 0)),
            ],
            out_specs=pl.BlockSpec((bt, N_p, mem_dim_p), lambda b: (b, 0, 0)),
            scratch_shapes=[pltpu.VMEM((bt, N_p, w_full), compute_dtype)],
        ),
        compiler_params=pltpu.CompilerParams(
            dimension_semantics=("parallel",),
            vmem_limit_bytes=vmem_limit),
    )(adj_c, x_c, w_all_c, b2_all, w_fin_c, b_out_p)

    return out_p[:, :N, :mem_dim]


def _reference(adj, x, w_list, b_list, w_out, b_out, *, mem_dim, layers):
    """Pure-JAX mirror of the PyTorch forward (dropout = identity)."""
    denom = jnp.sum(adj, axis=2, keepdims=True) + 1.0
    outputs = x
    cache = [outputs]
    out_list = []
    for l in range(layers):
        ax = jnp.einsum("bij,bjd->bid", adj, outputs, precision="highest")
        axw = jnp.matmul(ax, w_list[l], precision="highest") + b_list[l]
        axw = axw + (jnp.matmul(outputs, w_list[l], precision="highest")
                     + b_list[l])
        axw = axw / denom
        g = jax.nn.relu(axw)
        cache.append(g)
        outputs = jnp.concatenate(cache, axis=2)
        out_list.append(g)
    gcn = jnp.concatenate(out_list, axis=2) + x
    return jnp.matmul(gcn, w_out, precision="highest") + b_out


if __name__ == "__main__":
    B, N = 2, 8
    mem_dim, layers = 32, 2
    head_dim = mem_dim // layers

    key = jax.random.PRNGKey(0)
    k_adj, k_x, k_w, k_b, k_wo, k_bo = jax.random.split(key, 6)

    # adjacency: non-negative, like a dependency-graph adjacency matrix
    adj = (jax.random.uniform(k_adj, (B, N, N)) > 0.5).astype(jnp.float32)
    x = jax.random.normal(k_x, (B, N, mem_dim), dtype=jnp.float32)

    # deterministic parameter init (shapes from the module's __init__)
    w_keys = jax.random.split(k_w, layers)
    b_keys = jax.random.split(k_b, layers)
    w_list, b_list = [], []
    for l in range(layers):
        in_dim = mem_dim + head_dim * l
        bound = 1.0 / (in_dim ** 0.5)
        w_list.append(jax.random.uniform(
            w_keys[l], (in_dim, head_dim), minval=-bound, maxval=bound,
            dtype=jnp.float32))
        b_list.append(jax.random.uniform(
            b_keys[l], (head_dim,), minval=-bound, maxval=bound,
            dtype=jnp.float32))
    bound = 1.0 / (mem_dim ** 0.5)
    w_out = jax.random.uniform(k_wo, (mem_dim, mem_dim), minval=-bound,
                               maxval=bound, dtype=jnp.float32)
    b_out = jax.random.uniform(k_bo, (mem_dim,), minval=-bound, maxval=bound,
                               dtype=jnp.float32)

    out = graph_conv_layer(adj, x, w_list, b_list, w_out, b_out,
                           mem_dim=mem_dim, layers=layers)
    out = jax.block_until_ready(out)

    # Compare against an f32 reference evaluated on the same bf16-rounded
    # inputs (the kernel runs bf16 activations/weights with f32 accumulation).
    def bf16_round(a):
        return a.astype(jnp.bfloat16).astype(jnp.float32)

    ref = _reference(bf16_round(adj), bf16_round(x),
                     [bf16_round(w) for w in w_list], b_list,
                     bf16_round(w_out), b_out, mem_dim=mem_dim, layers=layers)
    assert out.shape == (B, N, mem_dim)
    assert jnp.allclose(out, ref, atol=5e-2, rtol=5e-2), (
        float(jnp.max(jnp.abs(out - ref))))

    print("KERNEL_OK")
</pallas_src>

<mosaic_0001>
module attributes {stable_mosaic.version = 11 : i64} {
  func.func @_gcn_kernel(%arg0: i32, %arg1: memref<2x16x16xbf16, #tpu.memory_space<vmem>>, %arg2: memref<2x16x128xbf16, #tpu.memory_space<vmem>>, %arg3: memref<2x384x128xbf16, #tpu.memory_space<vmem>>, %arg4: memref<2x1x128xf32, #tpu.memory_space<vmem>>, %arg5: memref<384x128xbf16, #tpu.memory_space<vmem>>, %arg6: memref<1x128xf32, #tpu.memory_space<vmem>>, %arg7: memref<2x16x128xf32, #tpu.memory_space<vmem>>, %arg8: memref<2x16x384xbf16, #tpu.memory_space<vmem>>) attributes {dimension_semantics = [#tpu.dimension_semantics<parallel>], iteration_bounds = array<i64: 1>, scalar_prefetch = 0 : i64, scratch_operands = 1 : i64, tpu.core_type = #tpu.core_type<tc>, window_params = [{transform_indices = @transform_0, window_bounds = array<i64: 2, 16, 16>}, {transform_indices = @transform_1, window_bounds = array<i64: 2, 16, 128>}, {pipeline_mode = #tpu.pipeline_mode<synchronous>, transform_indices = @transform_2, window_bounds = array<i64: 2, 384, 128>}, {pipeline_mode = #tpu.pipeline_mode<synchronous>, transform_indices = @transform_3, window_bounds = array<i64: 2, 1, 128>}, {pipeline_mode = #tpu.pipeline_mode<synchronous>, transform_indices = @transform_4, window_bounds = array<i64: 384, 128>}, {pipeline_mode = #tpu.pipeline_mode<synchronous>, transform_indices = @transform_5, window_bounds = array<i64: 1, 128>}, {transform_indices = @transform_6, window_bounds = array<i64: 2, 16, 128>}]} {
    %c0 = arith.constant 0 : index
    %c0_0 = arith.constant 0 : index
    %c0_1 = arith.constant 0 : index
    %0 = vector.load %arg2[%c0, %c0_0, %c0_1] : memref<2x16x128xbf16, #tpu.memory_space<vmem>>, vector<2x16x128xbf16>
    %c0_2 = arith.constant 0 : index
    %c0_3 = arith.constant 0 : index
    %c0_4 = arith.constant 0 : index
    %1 = vector.load %arg8[%c0_2, %c0_3, %c0_4] : memref<2x16x384xbf16, #tpu.memory_space<vmem>>, vector<2x16x128xbf16>
    tpu.vector_store %arg8[%c0_2, %c0_3, %c0_4], %0 {strides = array<i32>} : memref<2x16x384xbf16, #tpu.memory_space<vmem>>, vector<2x16x128xbf16>,
    %c0_5 = arith.constant 0 : index
    %c0_6 = arith.constant 0 : index
    %c0_7 = arith.constant 0 : index
    %2 = vector.load %arg1[%c0_5, %c0_6, %c0_7] : memref<2x16x16xbf16, #tpu.memory_space<vmem>>, vector<2x16x16xbf16>
    %3 = arith.extf %2 : vector<2x16x16xbf16> to vector<2x16x16xf32>
    %cst = arith.constant dense<0.000000e+00> : vector<2x16xf32>
    %4 = vector.multi_reduction <add>, %3, %cst [2] : vector<2x16x16xf32> to vector<2x16xf32>
    %5 = vector.shape_cast %4 : vector<2x16xf32> to vector<2x16x1xf32>
    %6 = tpu.reciprocal %5 {approx = true} : vector<2x16x1xf32> -> vector<2x16x1xf32>
    %c0_8 = arith.constant 0 : index
    %c0_9 = arith.constant 0 : index
    %c0_10 = arith.constant 0 : index
    %7 = vector.load %arg1[%c0_8, %c0_9, %c0_10] : memref<2x16x16xbf16, #tpu.memory_space<vmem>>, vector<2x16x16xbf16>
    %c0_11 = arith.constant 0 : index
    %c0_12 = arith.constant 0 : index
    %c0_13 = arith.constant 0 : index
    %8 = vector.load %arg8[%c0_11, %c0_12, %c0_13] : memref<2x16x384xbf16, #tpu.memory_space<vmem>>, vector<2x16x128xbf16>
    "tpu.trace_start"() <{level = 10 : i32, message = "bij,bjk->bik"}> : () -> ()
    %cst_14 = arith.constant dense<0.000000e+00> : vector<2x16x128xf32>
    %9 = tpu.matmul %7, %8, %cst_14 {dimension_numbers = #tpu.dot_dimension_numbers<[2], [1], [1], [2], [0, 0, 0, 1, 1, 2], [0], [0]>} : vector<2x16x16xbf16>, vector<2x16x128xbf16>, vector<2x16x128xf32> -> vector<2x16x128xf32>
    "tpu.trace_stop"() : () -> ()
    %10 = vector.shape_cast %9 : vector<2x16x128xf32> to vector<32x128xf32>
    %11 = arith.truncf %10 : vector<32x128xf32> to vector<32x128xbf16>
    %c0_15 = arith.constant 0 : index
    %c0_16 = arith.constant 0 : index
    %c0_17 = arith.constant 0 : index
    %12 = vector.load %arg3[%c0_15, %c0_16, %c0_17] : memref<2x384x128xbf16, #tpu.memory_space<vmem>>, vector<1x128x128xbf16>
    %13 = vector.shape_cast %12 : vector<1x128x128xbf16> to vector<128x128xbf16>
    %cst_18 = arith.constant dense<0.000000e+00> : vector<32x128xf32>
    %14 = tpu.matmul %11, %13, %cst_18 {dimension_numbers = #tpu.dot_dimension_numbers<[1], [0], [0], [1], [0, 0, 1, 1], [], []>} : vector<32x128xbf16>, vector<128x128xbf16>, vector<32x128xf32> -> vector<32x128xf32>
    %15 = vector.shape_cast %14 : vector<32x128xf32> to vector<2x16x128xf32>
    %c0_19 = arith.constant 0 : index
    %c0_20 = arith.constant 0 : index
    %c0_21 = arith.constant 0 : index
    %16 = vector.load %arg4[%c0_19, %c0_20, %c0_21] : memref<2x1x128xf32, #tpu.memory_space<vmem>>, vector<1x1x128xf32>
    %17 = vector.shape_cast %16 : vector<1x1x128xf32> to vector<1x128xf32>
    %18 = vector.shape_cast %17 : vector<1x128xf32> to vector<1x1x128xf32>
    %19 = vector.broadcast %18 : vector<1x1x128xf32> to vector<2x16x128xf32>
    %20 = arith.addf %15, %19 : vector<2x16x128xf32>
    %21 = vector.broadcast %6 : vector<2x16x1xf32> to vector<2x16x128xf32>
    %22 = arith.mulf %20, %21 : vector<2x16x128xf32>
    %cst_22 = arith.constant 0.000000e+00 : f32
    %23 = vector.broadcast %cst_22 : f32 to vector<2x16x128xf32>
    %24 = arith.maximumf %22, %23 : vector<2x16x128xf32>
    %25 = arith.truncf %24 : vector<2x16x128xf32> to vector<2x16x128xbf16>
    %c0_23 = arith.constant 0 : index
    %c0_24 = arith.constant 0 : index
    %c128 = arith.constant 128 : index
    %26 = vector.load %arg8[%c0_23, %c0_24, %c128] : memref<2x16x384xbf16, #tpu.memory_space<vmem>>, vector<2x16x128xbf16>
    tpu.vector_store %arg8[%c0_23, %c0_24, %c128], %25 {strides = array<i32>} : memref<2x16x384xbf16, #tpu.memory_space<vmem>>, vector<2x16x128xbf16>,
    %c0_25 = arith.constant 0 : index
    %c0_26 = arith.constant 0 : index
    %c0_27 = arith.constant 0 : index
    %27 = vector.load %arg1[%c0_25, %c0_26, %c0_27] : memref<2x16x16xbf16, #tpu.memory_space<vmem>>, vector<2x16x16xbf16>
    %c0_28 = arith.constant 0 : index
    %c0_29 = arith.constant 0 : index
    %c0_30 = arith.constant 0 : index
    %28 = vector.load %arg8[%c0_28, %c0_29, %c0_30] : memref<2x16x384xbf16, #tpu.memory_space<vmem>>, vector<2x16x256xbf16>
    "tpu.trace_start"() <{level = 10 : i32, message = "bij,bjk->bik"}> : () -> ()
    %cst_31 = arith.constant dense<0.000000e+00> : vector<2x16x256xf32>
    %29 = tpu.matmul %27, %28, %cst_31 {dimension_numbers = #tpu.dot_dimension_numbers<[2], [1], [1], [2], [0, 0, 0, 1, 1, 2], [0], [0]>} : vector<2x16x16xbf16>, vector<2x16x256xbf16>, vector<2x16x256xf32> -> vector<2x16x256xf32>
    "tpu.trace_stop"() : () -> ()
    %30 = vector.shape_cast %29 : vector<2x16x256xf32> to vector<32x256xf32>
    %31 = arith.truncf %30 : vector<32x256xf32> to vector<32x256xbf16>
    %c1 = arith.constant 1 : index
    %c0_32 = arith.constant 0 : index
    %c0_33 = arith.constant 0 : index
    %32 = vector.load %arg3[%c1, %c0_32, %c0_33] : memref<2x384x128xbf16, #tpu.memory_space<vmem>>, vector<1x256x128xbf16>
    %33 = vector.shape_cast %32 : vector<1x256x128xbf16> to vector<256x128xbf16>
    %cst_34 = arith.constant dense<0.000000e+00> : vector<32x128xf32>
    %34 = tpu.matmul %31, %33, %cst_34 {dimension_numbers = #tpu.dot_dimension_numbers<[1], [0], [0], [1], [0, 0, 1, 1], [], []>} : vector<32x256xbf16>, vector<256x128xbf16>, vector<32x128xf32> -> vector<32x128xf32>
    %35 = vector.shape_cast %34 : vector<32x128xf32> to vector<2x16x128xf32>
    %c1_35 = arith.constant 1 : index
    %c0_36 = arith.constant 0 : index
    %c0_37 = arith.constant 0 : index
    %36 = vector.load %arg4[%c1_35, %c0_36, %c0_37] : memref<2x1x128xf32, #tpu.memory_space<vmem>>, vector<1x1x128xf32>
    %37 = vector.shape_cast %36 : vector<1x1x128xf32> to vector<1x128xf32>
    %38 = vector.shape_cast %37 : vector<1x128xf32> to vector<1x1x128xf32>
    %39 = vector.broadcast %38 : vector<1x1x128xf32> to vector<2x16x128xf32>
    %40 = arith.addf %35, %39 : vector<2x16x128xf32>
    %41 = vector.broadcast %6 : vector<2x16x1xf32> to vector<2x16x128xf32>
    %42 = arith.mulf %40, %41 : vector<2x16x128xf32>
    %cst_38 = arith.constant 0.000000e+00 : f32
    %43 = vector.broadcast %cst_38 : f32 to vector<2x16x128xf32>
    %44 = arith.maximumf %42, %43 : vector<2x16x128xf32>
    %45 = arith.truncf %44 : vector<2x16x128xf32> to vector<2x16x128xbf16>
    %c0_39 = arith.constant 0 : index
    %c0_40 = arith.constant 0 : index
    %c256 = arith.constant 256 : index
    %46 = vector.load %arg8[%c0_39, %c0_40, %c256] : memref<2x16x384xbf16, #tpu.memory_space<vmem>>, vector<2x16x128xbf16>
    tpu.vector_store %arg8[%c0_39, %c0_40, %c256], %45 {strides = array<i32>} : memref<2x16x384xbf16, #tpu.memory_space<vmem>>, vector<2x16x128xbf16>,
    %c0_41 = arith.constant 0 : index
    %c0_42 = arith.constant 0 : index
    %c0_43 = arith.constant 0 : index
    %47 = vector.load %arg8[%c0_41, %c0_42, %c0_43] : memref<2x16x384xbf16, #tpu.memory_space<vmem>>, vector<2x16x384xbf16>
    %48 = vector.shape_cast %47 : vector<2x16x384xbf16> to vector<32x384xbf16>
    %c0_44 = arith.constant 0 : index
    %c0_45 = arith.constant 0 : index
    %49 = vector.load %arg5[%c0_44, %c0_45] : memref<384x128xbf16, #tpu.memory_space<vmem>>, vector<384x128xbf16>
    %cst_46 = arith.constant dense<0.000000e+00> : vector<32x128xf32>
    %50 = tpu.matmul %48, %49, %cst_46 {dimension_numbers = #tpu.dot_dimension_numbers<[1], [0], [0], [1], [0, 0, 1, 1], [], []>} : vector<32x384xbf16>, vector<384x128xbf16>, vector<32x128xf32> -> vector<32x128xf32>
    %c0_47 = arith.constant 0 : index
    %c0_48 = arith.constant 0 : index
    %51 = vector.load %arg6[%c0_47, %c0_48] : memref<1x128xf32, #tpu.memory_space<vmem>>, vector<1x128xf32>
    %52 = vector.broadcast %51 : vector<1x128xf32> to vector<32x128xf32>
    %53 = arith.addf %50, %52 : vector<32x128xf32>
    %54 = vector.shape_cast %53 : vector<32x128xf32> to vector<2x16x128xf32>
    %c0_49 = arith.constant 0 : index
    %c0_50 = arith.constant 0 : index
    %c0_51 = arith.constant 0 : index
    %55 = vector.load %arg7[%c0_49, %c0_50, %c0_51] : memref<2x16x128xf32, #tpu.memory_space<vmem>>, vector<2x16x128xf32>
    tpu.vector_store %arg7[%c0_49, %c0_50, %c0_51], %54 {strides = array<i32>} : memref<2x16x128xf32, #tpu.memory_space<vmem>>, vector<2x16x128xf32>,
    return
  }
  func.func @transform_0(%arg0: i32) -> (i32, i32, i32) {
    %c0_i32 = arith.constant 0 : i32
    %c0_i32_0 = arith.constant 0 : i32
    %c0_i32_1 = arith.constant 0 : i32
    return %arg0, %c0_i32, %c0_i32_0 : i32, i32, i32
  }
  func.func @transform_1(%arg0: i32) -> (i32, i32, i32) {
    %c0_i32 = arith.constant 0 : i32
    %c0_i32_0 = arith.constant 0 : i32
    %c0_i32_1 = arith.constant 0 : i32
    return %arg0, %c0_i32, %c0_i32_0 : i32, i32, i32
  }
  func.func @transform_2(%arg0: i32) -> (i32, i32, i32) {
    %c0_i32 = arith.constant 0 : i32
    %c0_i32_0 = arith.constant 0 : i32
    %c0_i32_1 = arith.constant 0 : i32
    %c0_i32_2 = arith.constant 0 : i32
    return %c0_i32, %c0_i32_0, %c0_i32_1 : i32, i32, i32
  }
  func.func @transform_3(%arg0: i32) -> (i32, i32, i32) {
    %c0_i32 = arith.constant 0 : i32
    %c0_i32_0 = arith.constant 0 : i32
    %c0_i32_1 = arith.constant 0 : i32
    %c0_i32_2 = arith.constant 0 : i32
    return %c0_i32, %c0_i32_0, %c0_i32_1 : i32, i32, i32
  }
  func.func @transform_4(%arg0: i32) -> (i32, i32) {
    %c0_i32 = arith.constant 0 : i32
    %c0_i32_0 = arith.constant 0 : i32
    %c0_i32_1 = arith.constant 0 : i32
    return %c0_i32, %c0_i32_0 : i32, i32
  }
  func.func @transform_5(%arg0: i32) -> (i32, i32) {
    %c0_i32 = arith.constant 0 : i32
    %c0_i32_0 = arith.constant 0 : i32
    %c0_i32_1 = arith.constant 0 : i32
    return %c0_i32, %c0_i32_0 : i32, i32
  }
  func.func @transform_6(%arg0: i32) -> (i32, i32, i32) {
    %c0_i32 = arith.constant 0 : i32
    %c0_i32_0 = arith.constant 0 : i32
    %c0_i32_1 = arith.constant 0 : i32
    return %arg0, %c0_i32, %c0_i32_0 : i32, i32, i32
  }
}

</mosaic_0001>

<llo_original>
// kernel: tpu_custom_call.1
$region0: #{tpu_custom_call.1}
  #allocation0 [shape = 'u32[]', space=smem, size = 0x4, offset = 0x4, fixed_abs, tag = 'smem constant byte address 0x4 - core index']
  #allocation1 [shape = 'u32[144,128]{1,0:T(1,128)}', space=vmem, size = 0x12000, scoped, tag = 'internal scratch']
  #allocation2 [shape = 'bf16[2,16,384]{2,1,0:T(8,128)(2,1)}', space=vmem, size = 0x6000, scoped, tag = 'scratch operand']
  %s0 = inlined_call_operand.hbm [shape: bf16[2,16,16], index: 0, kind: input, shape index: {}]
  %s1 = inlined_call_operand.hbm [shape: bf16[2,16,128], index: 1, kind: input, shape index: {}]
  %s2 = inlined_call_operand.hbm [shape: bf16[2,384,128], index: 2, kind: input, shape index: {}]
  %s3 = inlined_call_operand.vmem [shape: f32[2,1,128], index: 3, kind: input, shape index: {}]
  %s4 = inlined_call_operand.hbm [shape: bf16[384,128], index: 4, kind: input, shape index: {}]
  %s5 = inlined_call_operand.vmem [shape: f32[1,128], index: 5, kind: input, shape index: {}]
  %s6 = inlined_call_operand.hbm [shape: f32[2,16,128], index: 6, kind: output, shape index: {}]
  %s7 = sld [smem:[#allocation0]]
  $region50: #{tpu_custom_call.1} parent=0
    _
  %s9 = ssub.s32 1, %s7
  %s10 = scalar_select 0, %s9, %s7
  $region1: #{tpu_custom_call.1} parent=0
    #allocation3 [shape = 'u8[8192]{0}', space=vmem, size = 0x2000, scoped, tag = 'input window, operand 0, single buffered']
    #allocation4 [shape = 's32[1]{0}', space=sflag, size = 0x4, scoped, tag = 'scoped memory for tpu_custom_call.1']
    #allocation5 [shape = 's32[1]{0}', space=sflag, size = 0x4, scoped, tag = 'scoped memory for tpu_custom_call.1']
    #allocation6 [shape = 'u8[8192]{0}', space=vmem, size = 0x2000, scoped, tag = 'input window, operand 1, single buffered']
    #allocation7 [shape = 's32[1]{0}', space=sflag, size = 0x4, scoped, tag = 'scoped memory for tpu_custom_call.1']
    #allocation8 [shape = 'u8[196608]{0}', space=vmem, size = 0x30000, scoped, tag = 'input window, operand 2, single buffered']
    #allocation9 [shape = 'u8[98304]{0}', space=vmem, size = 0x18000, scoped, tag = 'input window, operand 4, single buffered']
    #allocation10 [shape = 's32[1]{0}', space=sflag, size = 0x4, scoped, tag = 'scoped memory for tpu_custom_call.1']
    #allocation11 [shape = 'u8[16384]{0}', space=vmem, size = 0x4000, scoped, tag = 'output window, operand 0, single buffered']
    %11 = vsyncpa [#allocation4], 0
    %12 = vsyncpa [#allocation7], 0
    %13 = vsyncpa [#allocation10], 0
    %14 = vsyncpa [#allocation5], 0
    // Predicated region
    $region2: #{tpu_custom_call.1} parent=1 // pred_check
      _
    $region3: #{tpu_custom_call.1} parent=1 // pred_check_branch
      %16 = sbr.rel (0) target = $region5
    $region4: #{tpu_custom_call.1} parent=1 // pred_region
      %s18 = ssub.s32 256, 256
      %19 = vsyncadd [#allocation4], %s18
      %s20 = sshll.u32 [#allocation3], 4
      %s21 = int_to_ptr.vmem [resolvable:$true] %s20
      %26 = dma.hbm_to_vmem [thread:$0]  %s0, 256, %s21, [#allocation4], 64, 64, 4
    $region5: #{tpu_custom_call.1} parent=1 // pred_fallthru
      _
    // Predicated region
    $region6: #{tpu_custom_call.1} parent=1 // pred_check
      _
    $region7: #{tpu_custom_call.1} parent=1 // pred_check_branch
      %28 = sbr.rel (0) target = $region9
    $region8: #{tpu_custom_call.1} parent=1 // pred_region
      %s30 = ssub.s32 256, 256
      %31 = vsyncadd [#allocation7], %s30
      %s32 = sshll.u32 [#allocation6], 4
      %s33 = int_to_ptr.vmem [resolvable:$true] %s32
      %38 = dma.hbm_to_vmem [thread:$0]  %s1, 256, %s33, [#allocation7], 64, 64, 4
    $region9: #{tpu_custom_call.1} parent=1 // pred_fallthru
      _
    // Predicated region
    $region10: #{tpu_custom_call.1} parent=1 // pred_check
      _
    $region11: #{tpu_custom_call.1} parent=1 // pred_check_branch
      %40 = sbr.rel (0) target = $region13
    $region12: #{tpu_custom_call.1} parent=1 // pred_region
      %s42 = ssub.s32 6144, 6144
      %43 = vsyncadd [#allocation7], %s42
      %s44 = sshll.u32 [#allocation8], 4
      %s45 = int_to_ptr.vmem [resolvable:$true] %s44
      %50 = dma.hbm_to_vmem [thread:$0]  %s2, 6144, %s45, [#allocation7], 64, 64, 4
    $region13: #{tpu_custom_call.1} parent=1 // pred_fallthru
      _
    // Predicated region
    $region14: #{tpu_custom_call.1} parent=1 // pred_check
      _
    $region15: #{tpu_custom_call.1} parent=1 // pred_check_branch
      %52 = sbr.rel (0) target = $region17
    $region16: #{tpu_custom_call.1} parent=1 // pred_region
      _
    $region17: #{tpu_custom_call.1} parent=1 // pred_fallthru
      _
    // Predicated region
    $region18: #{tpu_custom_call.1} parent=1 // pred_check
      _
    $region19: #{tpu_custom_call.1} parent=1 // pred_check_branch
      %54 = sbr.rel (0) target = $region21
    $region20: #{tpu_custom_call.1} parent=1 // pred_region
      %s56 = ssub.s32 3072, 3072
      %57 = vsyncadd [#allocation10], %s56
      %s58 = sshll.u32 [#allocation9], 4
      %s59 = int_to_ptr.vmem [resolvable:$true] %s58
      %64 = dma.hbm_to_vmem [thread:$0]  %s4, 3072, %s59, [#allocation10], 64, 64, 4
    $region21: #{tpu_custom_call.1} parent=1 // pred_fallthru
      _
    // Predicated region
    $region22: #{tpu_custom_call.1} parent=1 // pred_check
      _
    $region23: #{tpu_custom_call.1} parent=1 // pred_check_branch
      %66 = sbr.rel (0) target = $region25
    $region24: #{tpu_custom_call.1} parent=1 // pred_region
      _
    $region25: #{tpu_custom_call.1} parent=1 // pred_fallthru
      _
    // Predicated region
    $region26: #{tpu_custom_call.1} parent=1 // pred_check
      _
    $region27: #{tpu_custom_call.1} parent=1 // pred_check_branch
      %68 = sbr.rel (0) target = $region29
    $region28: #{tpu_custom_call.1} parent=1 // pred_region
      %69 = dma.done [#allocation4], 256
    $region29: #{tpu_custom_call.1} parent=1 // pred_fallthru
      _
    // Predicated region
    $region30: #{tpu_custom_call.1} parent=1 // pred_check
      _
    $region31: #{tpu_custom_call.1} parent=1 // pred_check_branch
      %71 = sbr.rel (0) target = $region33
    $region32: #{tpu_custom_call.1} parent=1 // pred_region
      %72 = dma.done [#allocation7], 256
    $region33: #{tpu_custom_call.1} parent=1 // pred_fallthru
      _
    // Predicated region
    $region34: #{tpu_custom_call.1} parent=1 // pred_check
      _
    $region35: #{tpu_custom_call.1} parent=1 // pred_check_branch
      %74 = sbr.rel (0) target = $region37
    $region36: #{tpu_custom_call.1} parent=1 // pred_region
      %75 = dma.done [#allocation7], 6144
    $region37: #{tpu_custom_call.1} parent=1 // pred_fallthru
      _
    // Predicated region
    $region38: #{tpu_custom_call.1} parent=1 // pred_check
      _
    $region39: #{tpu_custom_call.1} parent=1 // pred_check_branch
      %77 = sbr.rel (0) target = $region41
    $region40: #{tpu_custom_call.1} parent=1 // pred_region
      %78 = dma.done [#allocation10], 3072
    $region41: #{tpu_custom_call.1} parent=1 // pred_fallthru
      _
    %v80 = vld [vmem:[#allocation6] sm:$0xf]
    %v81 = vld [vmem:[#allocation6 + $0x4] sm:$0xf]
    %v82 = vld [vmem:[#allocation6 + $0x8] sm:$0xf]
    %v83 = vld [vmem:[#allocation6 + $0xc] sm:$0xf]
    %84 = vst [vmem:[#allocation2] sm:$0xf] %v80
    %85 = vst [vmem:[#allocation2 + $0xc] sm:$0xf] %v81
    %86 = vst [vmem:[#allocation2 + $0x18] sm:$0xf] %v82
    %87 = vst [vmem:[#allocation2 + $0x24] sm:$0xf] %v83
    %v88 = vld [vmem:[#allocation3] sm:$0xf]
    %v89 = vld [vmem:[#allocation3 + $0x4] sm:$0xf]
    %v90 = vld [vmem:[#allocation3 + $0x8] sm:$0xf]
    %v91 = vld [vmem:[#allocation3 + $0xc] sm:$0xf]
    %v92 = vunpack.c.l.bf16 %v88
    %v93 = vunpack.c.l.bf16 %v89
    %v94 = vunpack.c.l.bf16 %v90
    %v95 = vunpack.c.l.bf16 %v91
    %vm96 = vcmask 130048
    %v97 = vsel %vm96, %v92, 0.0
    %98 = vadd.xlane.f32.xlu0 %v97
    %v99 = vpop.xlane.xlu0 %98
    %v100 = vsel %vm96, %v93, 0.0
    %101 = vadd.xlane.f32.xlu0 %v100
    %v102 = vpop.xlane.xlu0 %101
    %v103 = vsel %vm96, %v94, 0.0
    %104 = vadd.xlane.f32.xlu0 %v103
    %v105 = vpop.xlane.xlu0 %104
    %v106 = vsel %vm96, %v95, 0.0
    %107 = vadd.xlane.f32.xlu0 %v106
    %v108 = vpop.xlane.xlu0 %107
    %v109 = vrcp.pop %v99
    %v110 = vrcp.pop %v102
    %v111 = vrcp.pop %v105
    %v112 = vrcp.pop %v108
    %v113 = vld [vmem:[#allocation2] sm:$0xf]
    %v114 = vld [vmem:[#allocation2 + $0xc] sm:$0xf]
    %v115 = vld [vmem:[#allocation2 + $0x18] sm:$0xf]
    %v116 = vld [vmem:[#allocation2 + $0x24] sm:$0xf]
    %v119 = vunpack.c.l.b16 %v88
    %v120 = vunpack.c.l.b16 %v89
    %v121 = vpack.c.b16 %v120, %v119
    %v124 = vunpack.c.l.b16 %v113
    %v125 = vunpack.c.l.b16 %v114
    %v126 = vpack.c.b16 %v125, %v124
    %v129 = vsel %vm96, %v121, 0
    %131 = vmatprep.subr.bf16.mxu0 0
    %132 = vmatpush1.bf16.msra.mxu0 0
    %133 = vmatprep.subr.bf16.mxu0 0
    %134 = vmatpush1.bf16.msra.mxu0 0
    %135 = vmatprep.subr.bf16.mxu0 0
    %136 = vmatpush1.bf16.msra.mxu0 0
    %137 = vmatprep.subr.bf16.mxu0 0
    %138 = vmatpush1.bf16.msra.mxu0 0
    %139 = vmatprep.subr.bf16.mxu0 0
    %140 = vmatpush1.bf16.msra.mxu0 0
    %141 = vmatprep.subr.bf16.mxu0 0
    %142 = vmatpush1.bf16.msra.mxu0 0
    %143 = vmatprep.subr.bf16.mxu0 0
    %144 = vmatpush1.bf16.msra.mxu0 0
    %145 = vmatprep.subr.bf16.mxu0 0
    %146 = vmatpush1.bf16.msra.mxu0 %v126
    %147 = vmatprep.subr.bf16.mxu0 0
    %148 = vmatpush2.bf16.msra.mxu0 0
    %149 = vmatprep.subr.bf16.mxu0 0
    %150 = vmatpush2.bf16.msra.mxu0 0
    %151 = vmatprep.subr.bf16.mxu0 0
    %152 = vmatpush2.bf16.msra.mxu0 0
    %153 = vmatprep.subr.bf16.mxu0 0
    %154 = vmatpush2.bf16.msra.mxu0 0
    %155 = vmatprep.subr.bf16.mxu0 0
    %156 = vmatpush2.bf16.msra.mxu0 0
    %157 = vmatprep.subr.bf16.mxu0 0
    %158 = vmatpush2.bf16.msra.mxu0 0
    %159 = vmatprep.subr.bf16.mxu0 0
    %160 = vmatpush2.bf16.msra.mxu0 0
    %161 = vmatprep.subr.bf16.mxu0 0
    %162 = vmatpush2.bf16.msra.mxu0 0
    %163 = vmatprep.mubr.bf16.mxu0 0
    %164 = vmatmul.mubr.bf16.gmra.mxu0 %v129
    %v165 = vpop.f32.mrf.mxu0
    %v166 = vadd.f32 0.0, %v165
    %v167 = vpop.f32.mrf.mxu0
    %v168 = vpop.f32.mrf.mxu0
    %v169 = vadd.f32 0.0, %v168
    %v170 = vpop.f32.mrf.mxu0
    %171 = vdwg.mxu0
    %v174 = vunpack.c.l.b16 %v90
    %v175 = vunpack.c.l.b16 %v91
    %v176 = vpack.c.b16 %v175, %v174
    %v179 = vunpack.c.l.b16 %v115
    %v180 = vunpack.c.l.b16 %v116
    %v181 = vpack.c.b16 %v180, %v179
    %v184 = vsel %vm96, %v176, 0
    %186 = vmatprep.subr.bf16.mxu0 0
    %187 = vmatpush1.bf16.msra.mxu0 0
    %188 = vmatprep.subr.bf16.mxu0 0
    %189 = vmatpush1.bf16.msra.mxu0 0
    %190 = vmatprep.subr.bf16.mxu0 0
    %191 = vmatpush1.bf16.msra.mxu0 0
    %192 = vmatprep.subr.bf16.mxu0 0
    %193 = vmatpush1.bf16.msra.mxu0 0
    %194 = vmatprep.subr.bf16.mxu0 0
    %195 = vmatpush1.bf16.msra.mxu0 0
    %196 = vmatprep.subr.bf16.mxu0 0
    %197 = vmatpush1.bf16.msra.mxu0 0
    %198 = vmatprep.subr.bf16.mxu0 0
    %199 = vmatpush1.bf16.msra.mxu0 0
    %200 = vmatprep.subr.bf16.mxu0 0
    %201 = vmatpush1.bf16.msra.mxu0 %v181
    %202 = vmatprep.subr.bf16.mxu0 0
    %203 = vmatpush2.bf16.msra.mxu0 0
    %204 = vmatprep.subr.bf16.mxu0 0
    %205 = vmatpush2.bf16.msra.mxu0 0
    %206 = vmatprep.subr.bf16.mxu0 0
    %207 = vmatpush2.bf16.msra.mxu0 0
    %208 = vmatprep.subr.bf16.mxu0 0
    %209 = vmatpush2.bf16.msra.mxu0 0
    %210 = vmatprep.subr.bf16.mxu0 0
    %211 = vmatpush2.bf16.msra.mxu0 0
    %212 = vmatprep.subr.bf16.mxu0 0
    %213 = vmatpush2.bf16.msra.mxu0 0
    %214 = vmatprep.subr.bf16.mxu0 0
    %215 = vmatpush2.bf16.msra.mxu0 0
    %216 = vmatprep.subr.bf16.mxu0 0
    %217 = vmatpush2.bf16.msra.mxu0 0
    %218 = vmatprep.mubr.bf16.mxu0 0
    %219 = vmatmul.mubr.bf16.gmra.mxu0 %v184
    %v220 = vpop.f32.mrf.mxu0
    %v221 = vadd.f32 0.0, %v220
    %v222 = vpop.f32.mrf.mxu0
    %v223 = vpop.f32.mrf.mxu0
    %v224 = vadd.f32 0.0, %v223
    %v225 = vpop.f32.mrf.mxu0
    %226 = vdwg.mxu0
    %v227 = vpack.c.bf16 %v169, %v166
    %v228 = vpack.c.bf16 %v224, %v221
    %v229 = vld [vmem:[#allocation8] sm:$0xf]
    %v230 = vld [vmem:[#allocation8 + $0x4] sm:$0xf]
    %v231 = vld [vmem:[#allocation8 + $0x8] sm:$0xf]
    %v232 = vld [vmem:[#allocation8 + $0xc] sm:$0xf]
    %v233 = vld [vmem:[#allocation8 + $0x10] sm:$0xf]
    %v234 = vld [vmem:[#allocation8 + $0x14] sm:$0xf]
    %v235 = vld [vmem:[#allocation8 + $0x18] sm:$0xf]
    %v236 = vld [vmem:[#allocation8 + $0x1c] sm:$0xf]
    %v237 = vld [vmem:[#allocation8 + $0x20] sm:$0xf]
    %v238 = vld [vmem:[#allocation8 + $0x24] sm:$0xf]
    %v239 = vld [vmem:[#allocation8 + $0x28] sm:$0xf]
    %v240 = vld [vmem:[#allocation8 + $0x2c] sm:$0xf]
    %v241 = vld [vmem:[#allocation8 + $0x30] sm:$0xf]
    %v242 = vld [vmem:[#allocation8 + $0x34] sm:$0xf]
    %v243 = vld [vmem:[#allocation8 + $0x38] sm:$0xf]
    %v244 = vld [vmem:[#allocation8 + $0x3c] sm:$0xf]
    %v261 = vunpack.c.l.b16 %v229
    %v262 = vunpack.c.l.b16 %v230
    %v263 = vunpack.c.l.b16 %v231
    %v264 = vunpack.c.l.b16 %v232
    %v265 = vunpack.c.l.b16 %v233
    %v266 = vunpack.c.l.b16 %v234
    %v267 = vunpack.c.l.b16 %v235
    %v268 = vunpack.c.l.b16 %v236
    %v269 = vunpack.c.l.b16 %v237
    %v270 = vunpack.c.l.b16 %v238
    %v271 = vunpack.c.l.b16 %v239
    %v272 = vunpack.c.l.b16 %v240
    %v273 = vunpack.c.l.b16 %v241
    %v274 = vunpack.c.l.b16 %v242
    %v275 = vunpack.c.l.b16 %v243
    %v276 = vunpack.c.l.b16 %v244
    %v277 = vpack.c.b16 %v262, %v261
    %v278 = vpack.c.b16 %v264, %v263
    %v279 = vpack.c.b16 %v266, %v265
    %v280 = vpack.c.b16 %v268, %v267
    %v281 = vpack.c.b16 %v270, %v269
    %v282 = vpack.c.b16 %v272, %v271
    %v283 = vpack.c.b16 %v274, %v273
    %v284 = vpack.c.b16 %v276, %v275
    %293 = vmatprep.subr.bf16.mxu0 0
    %294 = vmatpush1.bf16.msra.mxu0 %v284
    %295 = vmatprep.subr.bf16.mxu0 0
    %296 = vmatpush1.bf16.msra.mxu0 %v283
    %297 = vmatprep.subr.bf16.mxu0 0
    %298 = vmatpush1.bf16.msra.mxu0 %v282
    %299 = vmatprep.subr.bf16.mxu0 0
    %300 = vmatpush1.bf16.msra.mxu0 %v281
    %301 = vmatprep.subr.bf16.mxu0 0
    %302 = vmatpush1.bf16.msra.mxu0 %v280
    %303 = vmatprep.subr.bf16.mxu0 0
    %304 = vmatpush1.bf16.msra.mxu0 %v279
    %305 = vmatprep.subr.bf16.mxu0 0
    %306 = vmatpush1.bf16.msra.mxu0 %v278
    %307 = vmatprep.subr.bf16.mxu0 0
    %308 = vmatpush1.bf16.msra.mxu0 %v277
    %309 = vmatprep.subr.bf16.mxu0 0
    %310 = vmatpush2.bf16.msra.mxu0 0
    %311 = vmatprep.subr.bf16.mxu0 0
    %312 = vmatpush2.bf16.msra.mxu0 0
    %313 = vmatprep.subr.bf16.mxu0 0
    %314 = vmatpush2.bf16.msra.mxu0 0
    %315 = vmatprep.subr.bf16.mxu0 0
    %316 = vmatpush2.bf16.msra.mxu0 0
    %317 = vmatprep.subr.bf16.mxu0 0
    %318 = vmatpush2.bf16.msra.mxu0 0
    %319 = vmatprep.subr.bf16.mxu0 0
    %320 = vmatpush2.bf16.msra.mxu0 0
    %321 = vmatprep.subr.bf16.mxu0 0
    %322 = vmatpush2.bf16.msra.mxu0 0
    %323 = vmatprep.subr.bf16.mxu0 0
    %324 = vmatpush2.bf16.msra.mxu0 0
    %325 = vmatprep.mubr.bf16.mxu0 0
    %326 = vmatmul.mubr.bf16.gmra.mxu0 %v227
    %v327 = vpop.f32.mrf.mxu0
    %v328 = vadd.f32 0.0, %v327
    %v329 = vpop.f32.mrf.mxu0
    %v330 = vpop.f32.mrf.mxu0
    %v331 = vadd.f32 0.0, %v330
    %v332 = vpop.f32.mrf.mxu0
    %333 = vmatprep.mubr.bf16.mxu0 0
    %334 = vmatmul.mubr.bf16.gmra.mxu0 %v228
    %v335 = vpop.f32.mrf.mxu0
    %v336 = vadd.f32 0.0, %v335
    %v337 = vpop.f32.mrf.mxu0
    %v338 = vpop.f32.mrf.mxu0
    %v339 = vadd.f32 0.0, %v338
    %v340 = vpop.f32.mrf.mxu0
    %341 = vdwg.mxu0
    %v342 = vld [vmem:[%s3] sm:$0x1]
    %v344 = vlaneseq
    %v345 = vshrl.u32 %v344, 7
    %v346 = vsub.s32 0, %v345
    %v347 = vrot.slane %v342, %v346
    %v349 = vadd.f32 %v328, %v347
    %v350 = vadd.f32 %v331, %v347
    %v351 = vadd.f32 %v336, %v347
    %v352 = vadd.f32 %v339, %v347
    %v353 = vmul.f32 %v349, %v109
    %v354 = vmul.f32 %v350, %v110
    %v355 = vmul.f32 %v351, %v111
    %v356 = vmul.f32 %v352, %v112
    %v357 = vmax.f32 %v353, 0.0
    %v358 = vmax.f32 %v354, 0.0
    %v359 = vmax.f32 %v355, 0.0
    %v360 = vmax.f32 %v356, 0.0
    %v361 = vpack.c.bf16 %v358, %v357
    %v362 = vpack.c.bf16 %v360, %v359
    %v365 = vunpack.c.l.b16 %v361
    %v366 = vunpack.c.h.b16 %v361
    %v367 = vunpack.c.l.b16 %v362
    %v368 = vunpack.c.h.b16 %v362
    %v369 = vpack.c.b16 %v365, %v365
    %v370 = vpack.c.b16 %v366, %v366
    %v371 = vpack.c.b16 %v367, %v367
    %v372 = vpack.c.b16 %v368, %v368
    %377 = vst [vmem:[#allocation2 + $0x4] sm:$0xf] %v369
    %378 = vst [vmem:[#allocation2 + $0x10] sm:$0xf] %v370
    %379 = vst [vmem:[#allocation2 + $0x1c] sm:$0xf] %v371
    %380 = vst [vmem:[#allocation2 + $0x28] sm:$0xf] %v372
    %v381 = vld [vmem:[#allocation3] sm:$0xf]
    %v382 = vld [vmem:[#allocation3 + $0x4] sm:$0xf]
    %v383 = vld [vmem:[#allocation3 + $0x8] sm:$0xf]
    %v384 = vld [vmem:[#allocation3 + $0xc] sm:$0xf]
    %v385 = vld [vmem:[#allocation2] sm:$0xff]
    %v386 = vld [vmem:[#allocation2 + $0xc] sm:$0xff]
    %v387 = vld [vmem:[#allocation2 + $0x18] sm:$0xff]
    %v388 = vld [vmem:[#allocation2 + $0x24] sm:$0xff]
    %v391 = vunpack.c.l.b16 %v381
    %v392 = vunpack.c.l.b16 %v382
    %v393 = vpack.c.b16 %v392, %v391
    %v396 = vunpack.c.l.b16 %v385
    %v397 = vunpack.c.h.b16 %v385
    %v398 = vunpack.c.l.b16 %v386
    %v399 = vunpack.c.h.b16 %v386
    %v400 = vpack.c.b16 %v398, %v396
    %v401 = vpack.c.b16 %v399, %v397
    %v405 = vsel %vm96, %v393, 0
    %407 = vmatprep.subr.bf16.mxu0 0
    %408 = vmatpush1.bf16.msra.mxu0 0
    %409 = vmatprep.subr.bf16.mxu0 0
    %410 = vmatpush1.bf16.msra.mxu0 0
    %411 = vmatprep.subr.bf16.mxu0 0
    %412 = vmatpush1.bf16.msra.mxu0 0
    %413 = vmatprep.subr.bf16.mxu0 0
    %414 = vmatpush1.bf16.msra.mxu0 0
    %415 = vmatprep.subr.bf16.mxu0 0
    %416 = vmatpush1.bf16.msra.mxu0 0
    %417 = vmatprep.subr.bf16.mxu0 0
    %418 = vmatpush1.bf16.msra.mxu0 0
    %419 = vmatprep.subr.bf16.mxu0 0
    %420 = vmatpush1.bf16.msra.mxu0 0
    %421 = vmatprep.subr.bf16.mxu0 %v401
    %422 = vmatpush1.bf16.msra.mxu0 %v400
    %423 = vmatprep.subr.bf16.mxu0 0
    %424 = vmatpush2.bf16.msra.mxu0 0
    %425 = vmatprep.subr.bf16.mxu0 0
    %426 = vmatpush2.bf16.msra.mxu0 0
    %427 = vmatprep.subr.bf16.mxu0 0
    %428 = vmatpush2.bf16.msra.mxu0 0
    %429 = vmatprep.subr.bf16.mxu0 0
    %430 = vmatpush2.bf16.msra.mxu0 0
    %431 = vmatprep.subr.bf16.mxu0 0
    %432 = vmatpush2.bf16.msra.mxu0 0
    %433 = vmatprep.subr.bf16.mxu0 0
    %434 = vmatpush2.bf16.msra.mxu0 0
    %435 = vmatprep.subr.bf16.mxu0 0
    %436 = vmatpush2.bf16.msra.mxu0 0
    %437 = vmatprep.subr.bf16.mxu0 0
    %438 = vmatpush2.bf16.msra.mxu0 0
    %439 = vmatprep.mubr.bf16.mxu0 0
    %440 = vmatmul.mubr.bf16.gmra.mxu0 %v405
    %v441 = vpop.f32.mrf.mxu0
    %v442 = vadd.f32 0.0, %v441
    %v443 = vpop.f32.mrf.mxu0
    %v444 = vadd.f32 0.0, %v443
    %v445 = vpop.f32.mrf.mxu0
    %v446 = vadd.f32 0.0, %v445
    %v447 = vpop.f32.mrf.mxu0
    %v448 = vadd.f32 0.0, %v447
    %449 = vdwg.mxu0
    %v452 = vunpack.c.l.b16 %v383
    %v453 = vunpack.c.l.b16 %v384
    %v454 = vpack.c.b16 %v453, %v452
    %v457 = vunpack.c.l.b16 %v387
    %v458 = vunpack.c.h.b16 %v387
    %v459 = vunpack.c.l.b16 %v388
    %v460 = vunpack.c.h.b16 %v388
    %v461 = vpack.c.b16 %v459, %v457
    %v462 = vpack.c.b16 %v460, %v458
    %v466 = vsel %vm96, %v454, 0
    %468 = vmatprep.subr.bf16.mxu0 0
    %469 = vmatpush1.bf16.msra.mxu0 0
    %470 = vmatprep.subr.bf16.mxu0 0
    %471 = vmatpush1.bf16.msra.mxu0 0
    %472 = vmatprep.subr.bf16.mxu0 0
    %473 = vmatpush1.bf16.msra.mxu0 0
    %474 = vmatprep.subr.bf16.mxu0 0
    %475 = vmatpush1.bf16.msra.mxu0 0
    %476 = vmatprep.subr.bf16.mxu0 0
    %477 = vmatpush1.bf16.msra.mxu0 0
    %478 = vmatprep.subr.bf16.mxu0 0
    %479 = vmatpush1.bf16.msra.mxu0 0
    %480 = vmatprep.subr.bf16.mxu0 0
    %481 = vmatpush1.bf16.msra.mxu0 0
    %482 = vmatprep.subr.bf16.mxu0 %v462
    %483 = vmatpush1.bf16.msra.mxu0 %v461
    %484 = vmatprep.subr.bf16.mxu0 0
    %485 = vmatpush2.bf16.msra.mxu0 0
    %486 = vmatprep.subr.bf16.mxu0 0
    %487 = vmatpush2.bf16.msra.mxu0 0
    %488 = vmatprep.subr.bf16.mxu0 0
    %489 = vmatpush2.bf16.msra.mxu0 0
    %490 = vmatprep.subr.bf16.mxu0 0
    %491 = vmatpush2.bf16.msra.mxu0 0
    %492 = vmatprep.subr.bf16.mxu0 0
    %493 = vmatpush2.bf16.msra.mxu0 0
    %494 = vmatprep.subr.bf16.mxu0 0
    %495 = vmatpush2.bf16.msra.mxu0 0
    %496 = vmatprep.subr.bf16.mxu0 0
    %497 = vmatpush2.bf16.msra.mxu0 0
    %498 = vmatprep.subr.bf16.mxu0 0
    %499 = vmatpush2.bf16.msra.mxu0 0
    %500 = vmatprep.mubr.bf16.mxu0 0
    %501 = vmatmul.mubr.bf16.gmra.mxu0 %v466
    %v502 = vpop.f32.mrf.mxu0
    %v503 = vadd.f32 0.0, %v502
    %v504 = vpop.f32.mrf.mxu0
    %v505 = vadd.f32 0.0, %v504
    %v506 = vpop.f32.mrf.mxu0
    %v507 = vadd.f32 0.0, %v506
    %v508 = vpop.f32.mrf.mxu0
    %v509 = vadd.f32 0.0, %v508
    %510 = vdwg.mxu0
    %v511 = vpack.c.bf16 %v446, %v442
    %v512 = vpack.c.bf16 %v448, %v444
    %v513 = vpack.c.bf16 %v507, %v503
    %v514 = vpack.c.bf16 %v509, %v505
    %s515 = scalar_lea.vmem [#allocation8], 192
    %v516 = vld [vmem:[%s515] sm:$0xf]
    %v517 = vld [vmem:[%s515 + $0x4] sm:$0xf]
    %v518 = vld [vmem:[%s515 + $0x8] sm:$0xf]
    %v519 = vld [vmem:[%s515 + $0xc] sm:$0xf]
    %v520 = vld [vmem:[%s515 + $0x10] sm:$0xf]
    %v521 = vld [vmem:[%s515 + $0x14] sm:$0xf]
    %v522 = vld [vmem:[%s515 + $0x18] sm:$0xf]
    %v523 = vld [vmem:[%s515 + $0x1c] sm:$0xf]
    %v524 = vld [vmem:[%s515 + $0x20] sm:$0xf]
    %v525 = vld [vmem:[%s515 + $0x24] sm:$0xf]
    %v526 = vld [vmem:[%s515 + $0x28] sm:$0xf]
    %v527 = vld [vmem:[%s515 + $0x2c] sm:$0xf]
    %v528 = vld [vmem:[%s515 + $0x30] sm:$0xf]
    %v529 = vld [vmem:[%s515 + $0x34] sm:$0xf]
    %v530 = vld [vmem:[%s515 + $0x38] sm:$0xf]
    %v531 = vld [vmem:[%s515 + $0x3c] sm:$0xf]
    %v532 = vld [vmem:[%s515 + $0x40] sm:$0xf]
    %v533 = vld [vmem:[%s515 + $0x44] sm:$0xf]
    %v534 = vld [vmem:[%s515 + $0x48] sm:$0xf]
    %v535 = vld [vmem:[%s515 + $0x4c] sm:$0xf]
    %v536 = vld [vmem:[%s515 + $0x50] sm:$0xf]
    %v537 = vld [vmem:[%s515 + $0x54] sm:$0xf]
    %v538 = vld [vmem:[%s515 + $0x58] sm:$0xf]
    %v539 = vld [vmem:[%s515 + $0x5c] sm:$0xf]
    %v540 = vld [vmem:[%s515 + $0x60] sm:$0xf]
    %v541 = vld [vmem:[%s515 + $0x64] sm:$0xf]
    %v542 = vld [vmem:[%s515 + $0x68] sm:$0xf]
    %v543 = vld [vmem:[%s515 + $0x6c] sm:$0xf]
    %v544 = vld [vmem:[%s515 + $0x70] sm:$0xf]
    %v545 = vld [vmem:[%s515 + $0x74] sm:$0xf]
    %v546 = vld [vmem:[%s515 + $0x78] sm:$0xf]
    %v547 = vld [vmem:[%s515 + $0x7c] sm:$0xf]
    %v580 = vunpack.c.l.b16 %v516
    %v581 = vunpack.c.l.b16 %v517
    %v582 = vunpack.c.l.b16 %v518
    %v583 = vunpack.c.l.b16 %v519
    %v584 = vunpack.c.l.b16 %v520
    %v585 = vunpack.c.l.b16 %v521
    %v586 = vunpack.c.l.b16 %v522
    %v587 = vunpack.c.l.b16 %v523
    %v588 = vunpack.c.l.b16 %v524
    %v589 = vunpack.c.l.b16 %v525
    %v590 = vunpack.c.l.b16 %v526
    %v591 = vunpack.c.l.b16 %v527
    %v592 = vunpack.c.l.b16 %v528
    %v593 = vunpack.c.l.b16 %v529
    %v594 = vunpack.c.l.b16 %v530
    %v595 = vunpack.c.l.b16 %v531
    %v596 = vunpack.c.l.b16 %v532
    %v597 = vunpack.c.l.b16 %v533
    %v598 = vunpack.c.l.b16 %v534
    %v599 = vunpack.c.l.b16 %v535
    %v600 = vunpack.c.l.b16 %v536
    %v601 = vunpack.c.l.b16 %v537
    %v602 = vunpack.c.l.b16 %v538
    %v603 = vunpack.c.l.b16 %v539
    %v604 = vunpack.c.l.b16 %v540
    %v605 = vunpack.c.l.b16 %v541
    %v606 = vunpack.c.l.b16 %v542
    %v607 = vunpack.c.l.b16 %v543
    %v608 = vunpack.c.l.b16 %v544
    %v609 = vunpack.c.l.b16 %v545
    %v610 = vunpack.c.l.b16 %v546
    %v611 = vunpack.c.l.b16 %v547
    %v612 = vpack.c.b16 %v581, %v580
    %v613 = vpack.c.b16 %v583, %v582
    %v614 = vpack.c.b16 %v585, %v584
    %v615 = vpack.c.b16 %v587, %v586
    %v616 = vpack.c.b16 %v589, %v588
    %v617 = vpack.c.b16 %v591, %v590
    %v618 = vpack.c.b16 %v593, %v592
    %v619 = vpack.c.b16 %v595, %v594
    %v620 = vpack.c.b16 %v597, %v596
    %v621 = vpack.c.b16 %v599, %v598
    %v622 = vpack.c.b16 %v601, %v600
    %v623 = vpack.c.b16 %v603, %v602
    %v624 = vpack.c.b16 %v605, %v604
    %v625 = vpack.c.b16 %v607, %v606
    %v626 = vpack.c.b16 %v609, %v608
    %v627 = vpack.c.b16 %v611, %v610
    %644 = vmatprep.subr.bf16.mxu0 0
    %645 = vmatpush1.bf16.msra.mxu0 %v619
    %646 = vmatprep.subr.bf16.mxu0 0
    %647 = vmatpush1.bf16.msra.mxu0 %v618
    %648 = vmatprep.subr.bf16.mxu0 0
    %649 = vmatpush1.bf16.msra.mxu0 %v617
    %650 = vmatprep.subr.bf16.mxu0 0
    %651 = vmatpush1.bf16.msra.mxu0 %v616
    %652 = vmatprep.subr.bf16.mxu0 0
    %653 = vmatpush1.bf16.msra.mxu0 %v615
    %654 = vmatprep.subr.bf16.mxu0 0
    %655 = vmatpush1.bf16.msra.mxu0 %v614
    %656 = vmatprep.subr.bf16.mxu0 0
    %657 = vmatpush1.bf16.msra.mxu0 %v613
    %658 = vmatprep.subr.bf16.mxu0 0
    %659 = vmatpush1.bf16.msra.mxu0 %v612
    %660 = vmatprep.subr.bf16.mxu0 0
    %661 = vmatpush2.bf16.msra.mxu0 %v627
    %662 = vmatprep.subr.bf16.mxu0 0
    %663 = vmatpush2.bf16.msra.mxu0 %v626
    %664 = vmatprep.subr.bf16.mxu0 0
    %665 = vmatpush2.bf16.msra.mxu0 %v625
    %666 = vmatprep.subr.bf16.mxu0 0
    %667 = vmatpush2.bf16.msra.mxu0 %v624
    %668 = vmatprep.subr.bf16.mxu0 0
    %669 = vmatpush2.bf16.msra.mxu0 %v623
    %670 = vmatprep.subr.bf16.mxu0 0
    %671 = vmatpush2.bf16.msra.mxu0 %v622
    %672 = vmatprep.subr.bf16.mxu0 0
    %673 = vmatpush2.bf16.msra.mxu0 %v621
    %674 = vmatprep.subr.bf16.mxu0 0
    %675 = vmatpush2.bf16.msra.mxu0 %v620
    %676 = vmatprep.mubr.bf16.mxu0 %v512
    %677 = vmatmul.mubr.bf16.gmra.mxu0 %v511
    %v678 = vpop.f32.mrf.mxu0
    %v679 = vadd.f32 0.0, %v678
    %v680 = vpop.f32.mrf.mxu0
    %v681 = vpop.f32.mrf.mxu0
    %v682 = vadd.f32 0.0, %v681
    %v683 = vpop.f32.mrf.mxu0
    %684 = vmatprep.mubr.bf16.mxu0 %v514
    %685 = vmatmul.mubr.bf16.gmra.mxu0 %v513
    %v686 = vpop.f32.mrf.mxu0
    %v687 = vadd.f32 0.0, %v686
    %v688 = vpop.f32.mrf.mxu0
    %v689 = vpop.f32.mrf.mxu0
    %v690 = vadd.f32 0.0, %v689
    %v691 = vpop.f32.mrf.mxu0
    %692 = vdwg.mxu0
    %s693 = scalar_lea.vmem %s3, 1
    %v694 = vld [vmem:[%s693] sm:$0x1]
    %v696 = vlaneseq
    %v697 = vshrl.u32 %v696, 7
    %v698 = vsub.s32 0, %v697
    %v699 = vrot.slane %v694, %v698
    %v701 = vadd.f32 %v679, %v699
    %v702 = vadd.f32 %v682, %v699
    %v703 = vadd.f32 %v687, %v699
    %v704 = vadd.f32 %v690, %v699
    %v705 = vmul.f32 %v701, %v109
    %v706 = vmul.f32 %v702, %v110
    %v707 = vmul.f32 %v703, %v111
    %v708 = vmul.f32 %v704, %v112
    %v709 = vmax.f32 %v705, 0.0
    %v710 = vmax.f32 %v706, 0.0
    %v711 = vmax.f32 %v707, 0.0
    %v712 = vmax.f32 %v708, 0.0
    %v713 = vpack.c.bf16 %v710, %v709
    %v714 = vpack.c.bf16 %v712, %v711
    %v717 = vunpack.c.l.b16 %v713
    %v718 = vunpack.c.h.b16 %v713
    %v719 = vunpack.c.l.b16 %v714
    %v720 = vunpack.c.h.b16 %v714
    %v721 = vpack.c.b16 %v717, %v717
    %v722 = vpack.c.b16 %v718, %v718
    %v723 = vpack.c.b16 %v719, %v719
    %v724 = vpack.c.b16 %v720, %v720
    %729 = vst [vmem:[#allocation2 + $0x8] sm:$0xf] %v721
    %730 = vst [vmem:[#allocation2 + $0x14] sm:$0xf] %v722
    %731 = vst [vmem:[#allocation2 + $0x20] sm:$0xf] %v723
    %732 = vst [vmem:[#allocation2 + $0x2c] sm:$0xf] %v724
    %v733 = vld [vmem:[#allocation2] sm:$0xff]
    %v734 = vld [vmem:[#allocation2 + $0x8] sm:$0xf]
    %v735 = vld [vmem:[#allocation2 + $0xc] sm:$0xff]
    %v736 = vld [vmem:[#allocation2 + $0x14] sm:$0xf]
    %v737 = vld [vmem:[#allocation2 + $0x18] sm:$0xff]
    %v738 = vld [vmem:[#allocation2 + $0x20] sm:$0xf]
    %v739 = vld [vmem:[#allocation2 + $0x24] sm:$0xff]
    %v740 = vld [vmem:[#allocation2 + $0x2c] sm:$0xf]
    %v741 = vld [vmem:[#allocation9] sm:$0xf]
    %v742 = vld [vmem:[#allocation9 + $0x4] sm:$0xf]
    %v743 = vld [vmem:[#allocation9 + $0x8] sm:$0xf]
    %v744 = vld [vmem:[#allocation9 + $0xc] sm:$0xf]
    %v745 = vld [vmem:[#allocation9 + $0x10] sm:$0xf]
    %v746 = vld [vmem:[#allocation9 + $0x14] sm:$0xf]
    %v747 = vld [vmem:[#allocation9 + $0x18] sm:$0xf]
    %v748 = vld [vmem:[#allocation9 + $0x1c] sm:$0xf]
    %v749 = vld [vmem:[#allocation9 + $0x20] sm:$0xf]
    %v750 = vld [vmem:[#allocation9 + $0x24] sm:$0xf]
    %v751 = vld [vmem:[#allocation9 + $0x28] sm:$0xf]
    %v752 = vld [vmem:[#allocation9 + $0x2c] sm:$0xf]
    %v753 = vld [vmem:[#allocation9 + $0x30] sm:$0xf]
    %v754 = vld [vmem:[#allocation9 + $0x34] sm:$0xf]
    %v755 = vld [vmem:[#allocation9 + $0x38] sm:$0xf]
    %v756 = vld [vmem:[#allocation9 + $0x3c] sm:$0xf]
    %v757 = vld [vmem:[#allocation9 + $0x40] sm:$0xf]
    %v758 = vld [vmem:[#allocation9 + $0x44] sm:$0xf]
    %v759 = vld [vmem:[#allocation9 + $0x48] sm:$0xf]
    %v760 = vld [vmem:[#allocation9 + $0x4c] sm:$0xf]
    %v761 = vld [vmem:[#allocation9 + $0x50] sm:$0xf]
    %v762 = vld [vmem:[#allocation9 + $0x54] sm:$0xf]
    %v763 = vld [vmem:[#allocation9 + $0x58] sm:$0xf]
    %v764 = vld [vmem:[#allocation9 + $0x5c] sm:$0xf]
    %v765 = vld [vmem:[#allocation9 + $0x60] sm:$0xf]
    %v766 = vld [vmem:[#allocation9 + $0x64] sm:$0xf]
    %v767 = vld [vmem:[#allocation9 + $0x68] sm:$0xf]
    %v768 = vld [vmem:[#allocation9 + $0x6c] sm:$0xf]
    %v769 = vld [vmem:[#allocation9 + $0x70] sm:$0xf]
    %v770 = vld [vmem:[#allocation9 + $0x74] sm:$0xf]
    %v771 = vld [vmem:[#allocation9 + $0x78] sm:$0xf]
    %v772 = vld [vmem:[#allocation9 + $0x7c] sm:$0xf]
    %v773 = vld [vmem:[#allocation9 + $0x80] sm:$0xf]
    %v774 = vld [vmem:[#allocation9 + $0x84] sm:$0xf]
    %v775 = vld [vmem:[#allocation9 + $0x88] sm:$0xf]
    %v776 = vld [vmem:[#allocation9 + $0x8c] sm:$0xf]
    %v777 = vld [vmem:[#allocation9 + $0x90] sm:$0xf]
    %v778 = vld [vmem:[#allocation9 + $0x94] sm:$0xf]
    %v779 = vld [vmem:[#allocation9 + $0x98] sm:$0xf]
    %v780 = vld [vmem:[#allocation9 + $0x9c] sm:$0xf]
    %v781 = vld [vmem:[#allocation9 + $0xa0] sm:$0xf]
    %v782 = vld [vmem:[#allocation9 + $0xa4] sm:$0xf]
    %v783 = vld [vmem:[#allocation9 + $0xa8] sm:$0xf]
    %v784 = vld [vmem:[#allocation9 + $0xac] sm:$0xf]
    %v785 = vld [vmem:[#allocation9 + $0xb0] sm:$0xf]
    %v786 = vld [vmem:[#allocation9 + $0xb4] sm:$0xf]
    %v787 = vld [vmem:[#allocation9 + $0xb8] sm:$0xf]
    %v788 = vld [vmem:[#allocation9 + $0xbc] sm:$0xf]
    %v789 = vld [vmem:[%s5] sm:$0x1]
    %v791 = vlaneseq
    %v792 = vshrl.u32 %v791, 7
    %v793 = vsub.s32 0, %v792
    %v794 = vrot.slane %v789, %v793
    %v804 = vunpack.c.l.b16 %v733
    %v805 = vunpack.c.h.b16 %v733
    %v806 = vunpack.c.l.b16 %v734
    %v807 = vunpack.c.l.b16 %v735
    %v808 = vunpack.c.h.b16 %v735
    %v809 = vunpack.c.l.b16 %v736
    %v810 = vunpack.c.l.b16 %v737
    %v811 = vunpack.c.h.b16 %v737
    %v812 = vunpack.c.l.b16 %v738
    %v813 = vunpack.c.l.b16 %v739
    %v814 = vunpack.c.h.b16 %v739
    %v815 = vunpack.c.l.b16 %v740
    %v816 = vpack.c.b16 %v807, %v804
    %v817 = vpack.c.b16 %v808, %v805
    %v818 = vpack.c.b16 %v809, %v806
    %v819 = vpack.c.b16 %v813, %v810
    %v820 = vpack.c.b16 %v814, %v811
    %v821 = vpack.c.b16 %v815, %v812
    %v876 = vunpack.c.l.b16 %v741
    %v877 = vunpack.c.l.b16 %v742
    %v878 = vunpack.c.l.b16 %v743
    %v879 = vunpack.c.l.b16 %v744
    %v880 = vunpack.c.l.b16 %v745
    %v881 = vunpack.c.l.b16 %v746
    %v882 = vunpack.c.l.b16 %v747
    %v883 = vunpack.c.l.b16 %v748
    %v884 = vunpack.c.l.b16 %v749
    %v885 = vunpack.c.l.b16 %v750
    %v886 = vunpack.c.l.b16 %v751
    %v887 = vunpack.c.l.b16 %v752
    %v888 = vunpack.c.l.b16 %v753
    %v889 = vunpack.c.l.b16 %v754
    %v890 = vunpack.c.l.b16 %v755
    %v891 = vunpack.c.l.b16 %v756
    %v892 = vunpack.c.l.b16 %v757
    %v893 = vunpack.c.l.b16 %v758
    %v894 = vunpack.c.l.b16 %v759
    %v895 = vunpack.c.l.b16 %v760
    %v896 = vunpack.c.l.b16 %v761
    %v897 = vunpack.c.l.b16 %v762
    %v898 = vunpack.c.l.b16 %v763
    %v899 = vunpack.c.l.b16 %v764
    %v900 = vunpack.c.l.b16 %v765
    %v901 = vunpack.c.l.b16 %v766
    %v902 = vunpack.c.l.b16 %v767
    %v903 = vunpack.c.l.b16 %v768
    %v904 = vunpack.c.l.b16 %v769
    %v905 = vunpack.c.l.b16 %v770
    %v906 = vunpack.c.l.b16 %v771
    %v907 = vunpack.c.l.b16 %v772
    %v908 = vunpack.c.l.b16 %v773
    %v909 = vunpack.c.l.b16 %v774
    %v910 = vunpack.c.l.b16 %v775
    %v911 = vunpack.c.l.b16 %v776
    %v912 = vunpack.c.l.b16 %v777
    %v913 = vunpack.c.l.b16 %v778
    %v914 = vunpack.c.l.b16 %v779
    %v915 = vunpack.c.l.b16 %v780
    %v916 = vunpack.c.l.b16 %v781
    %v917 = vunpack.c.l.b16 %v782
    %v918 = vunpack.c.l.b16 %v783
    %v919 = vunpack.c.l.b16 %v784
    %v920 = vunpack.c.l.b16 %v785
    %v921 = vunpack.c.l.b16 %v786
    %v922 = vunpack.c.l.b16 %v787
    %v923 = vunpack.c.l.b16 %v788
    %v924 = vpack.c.b16 %v877, %v876
    %v925 = vpack.c.b16 %v879, %v878
    %v926 = vpack.c.b16 %v881, %v880
    %v927 = vpack.c.b16 %v883, %v882
    %v928 = vpack.c.b16 %v885, %v884
    %v929 = vpack.c.b16 %v887, %v886
    %v930 = vpack.c.b16 %v889, %v888
    %v931 = vpack.c.b16 %v891, %v890
    %v932 = vpack.c.b16 %v893, %v892
    %v933 = vpack.c.b16 %v895, %v894
    %v934 = vpack.c.b16 %v897, %v896
    %v935 = vpack.c.b16 %v899, %v898
    %v936 = vpack.c.b16 %v901, %v900
    %v937 = vpack.c.b16 %v903, %v902
    %v938 = vpack.c.b16 %v905, %v904
    %v939 = vpack.c.b16 %v907, %v906
    %v940 = vpack.c.b16 %v909, %v908
    %v941 = vpack.c.b16 %v911, %v910
    %v942 = vpack.c.b16 %v913, %v912
    %v943 = vpack.c.b16 %v915, %v914
    %v944 = vpack.c.b16 %v917, %v916
    %v945 = vpack.c.b16 %v919, %v918
    %v946 = vpack.c.b16 %v921, %v920
    %v947 = vpack.c.b16 %v923, %v922
    %972 = vmatprep.subr.bf16.mxu0 0
    %973 = vmatpush1.bf16.msra.mxu0 %v931
    %974 = vmatprep.subr.bf16.mxu0 0
    %975 = vmatpush1.bf16.msra.mxu0 %v930
    %976 = vmatprep.subr.bf16.mxu0 0
    %977 = vmatpush1.bf16.msra.mxu0 %v929
    %978 = vmatprep.subr.bf16.mxu0 0
    %979 = vmatpush1.bf16.msra.mxu0 %v928
    %980 = vmatprep.subr.bf16.mxu0 0
    %981 = vmatpush1.bf16.msra.mxu0 %v927
    %982 = vmatprep.subr.bf16.mxu0 0
    %983 = vmatpush1.bf16.msra.mxu0 %v926
    %984 = vmatprep.subr.bf16.mxu0 0
    %985 = vmatpush1.bf16.msra.mxu0 %v925
    %986 = vmatprep.subr.bf16.mxu0 0
    %987 = vmatpush1.bf16.msra.mxu0 %v924
    %988 = vmatprep.subr.bf16.mxu0 0
    %989 = vmatpush2.bf16.msra.mxu0 %v939
    %990 = vmatprep.subr.bf16.mxu0 0
    %991 = vmatpush2.bf16.msra.mxu0 %v938
    %992 = vmatprep.subr.bf16.mxu0 0
    %993 = vmatpush2.bf16.msra.mxu0 %v937
    %994 = vmatprep.subr.bf16.mxu0 0
    %995 = vmatpush2.bf16.msra.mxu0 %v936
    %996 = vmatprep.subr.bf16.mxu0 0
    %997 = vmatpush2.bf16.msra.mxu0 %v935
    %998 = vmatprep.subr.bf16.mxu0 0
    %999 = vmatpush2.bf16.msra.mxu0 %v934
    %1000 = vmatprep.subr.bf16.mxu0 0
    %1001 = vmatpush2.bf16.msra.mxu0 %v933
    %1002 = vmatprep.subr.bf16.mxu0 0
    %1003 = vmatpush2.bf16.msra.mxu0 %v932
    %1004 = vmatprep.mubr.bf16.mxu0 %v817
    %1005 = vmatmul.mubr.bf16.gmra.mxu0 %v816
    %v1006 = vpop.f32.mrf.mxu0
    %v1007 = vadd.f32 %v794, %v1006
    %v1008 = vpop.f32.mrf.mxu0
    %v1009 = vpop.f32.mrf.mxu0
    %v1010 = vadd.f32 %v794, %v1009
    %v1011 = vpop.f32.mrf.mxu0
    %1012 = vmatprep.mubr.bf16.mxu0 %v820
    %1013 = vmatmul.mubr.bf16.gmra.mxu0 %v819
    %v1014 = vpop.f32.mrf.mxu0
    %v1015 = vadd.f32 %v794, %v1014
    %v1016 = vpop.f32.mrf.mxu0
    %v1017 = vpop.f32.mrf.mxu0
    %v1018 = vadd.f32 %v794, %v1017
    %v1019 = vpop.f32.mrf.mxu0
    %1020 = vdwg.mxu0
    %1021 = vmatprep.subr.bf16.mxu0 0
    %1022 = vmatpush1.bf16.msra.mxu0 %v947
    %1023 = vmatprep.subr.bf16.mxu0 0
    %1024 = vmatpush1.bf16.msra.mxu0 %v946
    %1025 = vmatprep.subr.bf16.mxu0 0
    %1026 = vmatpush1.bf16.msra.mxu0 %v945
    %1027 = vmatprep.subr.bf16.mxu0 0
    %1028 = vmatpush1.bf16.msra.mxu0 %v944
    %1029 = vmatprep.subr.bf16.mxu0 0
    %1030 = vmatpush1.bf16.msra.mxu0 %v943
    %1031 = vmatprep.subr.bf16.mxu0 0
    %1032 = vmatpush1.bf16.msra.mxu0 %v942
    %1033 = vmatprep.subr.bf16.mxu0 0
    %1034 = vmatpush1.bf16.msra.mxu0 %v941
    %1035 = vmatprep.subr.bf16.mxu0 0
    %1036 = vmatpush1.bf16.msra.mxu0 %v940
    %1037 = vmatprep.subr.bf16.mxu0 0
    %1038 = vmatpush2.bf16.msra.mxu0 0
    %1039 = vmatprep.subr.bf16.mxu0 0
    %1040 = vmatpush2.bf16.msra.mxu0 0
    %1041 = vmatprep.subr.bf16.mxu0 0
    %1042 = vmatpush2.bf16.msra.mxu0 0
    %1043 = vmatprep.subr.bf16.mxu0 0
    %1044 = vmatpush2.bf16.msra.mxu0 0
    %1045 = vmatprep.subr.bf16.mxu0 0
    %1046 = vmatpush2.bf16.msra.mxu0 0
    %1047 = vmatprep.subr.bf16.mxu0 0
    %1048 = vmatpush2.bf16.msra.mxu0 0
    %1049 = vmatprep.subr.bf16.mxu0 0
    %1050 = vmatpush2.bf16.msra.mxu0 0
    %1051 = vmatprep.subr.bf16.mxu0 0
    %1052 = vmatpush2.bf16.msra.mxu0 0
    %1053 = vmatprep.mubr.bf16.mxu0 0
    %1054 = vmatmul.mubr.bf16.gmra.mxu0 %v818
    %v1055 = vpop.f32.mrf.mxu0
    %v1056 = vadd.f32 %v1007, %v1055
    %v1057 = vpop.f32.mrf.mxu0
    %v1058 = vpop.f32.mrf.mxu0
    %v1059 = vadd.f32 %v1010, %v1058
    %v1060 = vpop.f32.mrf.mxu0
    %1061 = vmatprep.mubr.bf16.mxu0 0
    %1062 = vmatmul.mubr.bf16.gmra.mxu0 %v821
    %v1063 = vpop.f32.mrf.mxu0
    %v1064 = vadd.f32 %v1015, %v1063
    %v1065 = vpop.f32.mrf.mxu0
    %v1066 = vpop.f32.mrf.mxu0
    %v1067 = vadd.f32 %v1018, %v1066
    %v1068 = vpop.f32.mrf.mxu0
    %1069 = vdwg.mxu0
    %1070 = vst [vmem:[#allocation11] sm:$0xff] %v1056
    %1071 = vst [vmem:[#allocation11 + $0x8] sm:$0xff] %v1059
    %1072 = vst [vmem:[#allocation11 + $0x10] sm:$0xff] %v1064
    %1073 = vst [vmem:[#allocation11 + $0x18] sm:$0xff] %v1067
    // Predicated region
    $region42: #{tpu_custom_call.1} parent=1 // pred_check
      _
    $region43: #{tpu_custom_call.1} parent=1 // pred_check_branch
      %1075 = sbr.rel (0) target = $region45
    $region44: #{tpu_custom_call.1} parent=1 // pred_region
      %s1077 = ssub.s32 512, 512
      %1078 = vsyncadd [#allocation5], %s1077
      %s1079 = sshll.u32 [#allocation11], 4
      %s1080 = int_to_ptr.vmem [resolvable:$true] %s1079
      %1085 = dma.vmem_to_hbm [thread:$0]  %s1080, 512, %s6, [#allocation5], 128, 128, 8
    $region45: #{tpu_custom_call.1} parent=1 // pred_fallthru
      _
    // Predicated region
    $region46: #{tpu_custom_call.1} parent=1 // pred_check
      _
    $region47: #{tpu_custom_call.1} parent=1 // pred_check_branch
      %1087 = sbr.rel (0) target = $region49
    $region48: #{tpu_custom_call.1} parent=1 // pred_region
      %1088 = dma.done [#allocation5], 512
    $region49: #{tpu_custom_call.1} parent=1 // pred_fallthru
      _
    %1089 = vsyncpa [#allocation4], 1
    %1090 = vsyncpa [#allocation7], 1
    %1091 = vsyncpa [#allocation10], 1
    %1092 = vsyncpa [#allocation5], 1

</llo_original>
